<compile_context>
chip_gen: v7x
topology: tpu7x:2x2x1
jax: 0.10.0
libtpu: 0.0.40
codegen_flags: <defaults>
</compile_context>

<pallas_src>
import functools
import math

import jax
import jax.numpy as jnp
from jax.experimental import pallas as pl
from jax.experimental.pallas import tpu as pltpu


# ----------------------------- shared helpers -----------------------------------------

def _layer_norm(x, w, b, eps=1e-5):
    mu = jnp.mean(x, axis=-1, keepdims=True)
    var = jnp.mean((x - mu) ** 2, axis=-1, keepdims=True)
    return (x - mu) * jax.lax.rsqrt(var + eps) * w + b


def _pick_row_block(L):
    """Largest multiple-of-8 divisor of L, capped at 128 (e.g. 120 for L=600)."""
    for t in range(128, 7, -8):
        if L % t == 0:
            return t
    return L          # fallback: a single block of all rows (tail handled in-kernel)


# ---------------- Kernel 1: dilated Conv1d(4->d, k=9, pad=8, dil=2) + BN1d + ReLU -----

def _conv1d_bn_relu_kernel(xs_ref, w_ref, scale_ref, shift_ref, out_ref):
    # xs: (36, TN) im2col columns; w: (d, 36); scale/shift: (d, 1); out: (d, TN)
    acc = jnp.dot(w_ref[...], xs_ref[...], preferred_element_type=jnp.float32)
    out_ref[...] = jnp.maximum(acc * scale_ref[...] + shift_ref[...], 0.0)


def conv1d_bn_relu(x, cp, L, d):
    # x: (B, 4, L) NCW.  Conv1d(padding=8, dilation=2, kernel=9) keeps length L.
    B = x.shape[0]
    x_pad = jnp.pad(x, ((0, 0), (0, 0), (8, 8)))                       # (B, 4, L+16)
    xs = jnp.stack([x_pad[:, :, 2 * k:2 * k + L] for k in range(9)], axis=0)  # (9,B,4,L)
    xs = jnp.transpose(xs, (0, 2, 1, 3)).reshape(36, B * L)            # row = k*4 + c
    w_flat = jnp.transpose(cp['w_conv'], (0, 2, 1)).reshape(d, 36)     # col = k*4 + c
    n = B * L
    if n <= 512:
        tn, npad = n, n
    else:
        tn = 512
        npad = ((n + tn - 1) // tn) * tn
    if npad != n:
        xs = jnp.pad(xs, ((0, 0), (0, npad - n)))
    out = pl.pallas_call(
        _conv1d_bn_relu_kernel,
        out_shape=jax.ShapeDtypeStruct((d, npad), jnp.float32),
        grid=(npad // tn,),
        in_specs=[pl.BlockSpec((36, tn), lambda j: (0, j)),
                  pl.BlockSpec((d, 36), lambda j: (0, 0)),
                  pl.BlockSpec((d, 1), lambda j: (0, 0)),
                  pl.BlockSpec((d, 1), lambda j: (0, 0))],
        out_specs=pl.BlockSpec((d, tn), lambda j: (0, j)),
        compiler_params=pltpu.CompilerParams(dimension_semantics=("parallel",)),
    )(xs, w_flat, cp['scale'], cp['shift'])
    out = out[:, :n]
    return jnp.transpose(out.reshape(d, B, L), (1, 2, 0))              # (B, L, d)


# ---------------- Kernel 2: nn.TransformerEncoderLayer(2d, nhead=2), post-norm --------

def _transformer_layer_kernel(x_ref, wqkv_ref, bqkv_ref, wo_ref, bo_ref,
                              ln1w_ref, ln1b_ref, w1_ref, b1_ref, w2_ref, b2_ref,
                              ln2w_ref, ln2b_ref, out_ref, *, nhead, ffn_chunk):
    x = x_ref[0]                                          # (L, E) f32
    L, E = x.shape
    hd = E // nhead
    inv_sqrt = 1.0 / math.sqrt(hd)
    bf16 = jnp.bfloat16
    xb = x.astype(bf16)

    # fused QKV projection: one (L,E)@(E,3E) matmul instead of six tiny per-head matmuls
    qkv = jnp.dot(xb, wqkv_ref[...], preferred_element_type=jnp.float32) + bqkv_ref[...]

    head_outs = []
    for h in range(nhead):                                # nhead=2, static unroll
        q = qkv[:, h * hd:(h + 1) * hd]
        k = qkv[:, E + h * hd:E + (h + 1) * hd]
        v = qkv[:, 2 * E + h * hd:2 * E + (h + 1) * hd]
        s = jax.lax.dot_general((q * inv_sqrt).astype(bf16), k.astype(bf16),
                                (((1,), (1,)), ((), ())),
                                preferred_element_type=jnp.float32)        # (L, L)
        s = s - jnp.max(s, axis=-1, keepdims=True)
        p = jnp.exp(s)
        p = p * pl.reciprocal(jnp.sum(p, axis=-1, keepdims=True), approx=True)
        head_outs.append(jnp.dot(p.astype(bf16), v.astype(bf16),
                                 preferred_element_type=jnp.float32))      # (L, hd)
    attn = jnp.concatenate(head_outs, axis=-1)                             # (L, E)
    attn = jnp.dot(attn.astype(bf16), wo_ref[...],
                   preferred_element_type=jnp.float32) + bo_ref[...]
    # TODO(synk): dropout (p=0.1) omitted -- eval-mode semantics.
    x1 = _layer_norm(x + attn, ln1w_ref[...], ln1b_ref[...])

    # FFN, row-chunked so the f32 (chunk, 2048) intermediate stays small at large L
    x1b = x1.astype(bf16)
    ff_parts = []
    for r0 in range(0, L, ffn_chunk):
        rc = min(ffn_chunk, L - r0)
        h1 = jnp.maximum(
            jnp.dot(x1b[r0:r0 + rc], w1_ref[...], preferred_element_type=jnp.float32)
            + b1_ref[...], 0.0)
        ff_parts.append(jnp.dot(h1.astype(bf16), w2_ref[...],
                                preferred_element_type=jnp.float32) + b2_ref[...])
    ff = ff_parts[0] if len(ff_parts) == 1 else jnp.concatenate(ff_parts, axis=0)
    out_ref[0] = _layer_norm(x1 + ff, ln2w_ref[...], ln2b_ref[...])


def transformer_layer(x, lp, nhead, ffn_chunk=256):
    B, L, E = x.shape
    kernel = functools.partial(_transformer_layer_kernel, nhead=nhead, ffn_chunk=ffn_chunk)
    full = lambda a: pl.BlockSpec(a.shape, lambda b: (0,) * a.ndim)
    return pl.pallas_call(
        kernel,
        out_shape=jax.ShapeDtypeStruct((B, L, E), jnp.float32),
        grid=(B,),
        in_specs=[pl.BlockSpec((1, L, E), lambda b: (b, 0, 0)),
                  full(lp['wqkv']), full(lp['bqkv']), full(lp['wo']), full(lp['bo']),
                  full(lp['ln1_w']), full(lp['ln1_b']),
                  full(lp['w1']), full(lp['b1']), full(lp['w2']), full(lp['b2']),
                  full(lp['ln2_w']), full(lp['ln2_b'])],
        out_specs=pl.BlockSpec((1, L, E), lambda b: (b, 0, 0)),
        compiler_params=pltpu.CompilerParams(
            dimension_semantics=("parallel",),
            vmem_limit_bytes=48 * 1024 * 1024),   # <= v7x physical 64MiB, ample on v5e/v6e
    )(x, lp['wqkv'], lp['bqkv'], lp['wo'], lp['bo'],
      lp['ln1_w'], lp['ln1_b'], lp['w1'], lp['b1'], lp['w2'], lp['b2'],
      lp['ln2_w'], lp['ln2_b'])


# -------- Kernel 3a: per-position projections P/Q (first 1x1 conv, split on min/max) ---
# matrix_rep pair features are [seq(min), seq(max), pos(min), pos(max)]; with W1 split
# into those row-blocks, h1[i,j] = relu(P[min(i,j)] + Q[max(i,j)]) where
#   P[t] = s[t]@W1_smin + pos[t]@W1_pmin + b1   and   Q[t] = s[t]@W1_smax + pos[t]@W1_pmax

def _pair_proj_kernel(s_ref, pos_ref, wsmin_ref, wsmax_ref, wpmin_ref, wpmax_ref, b1_ref,
                      p_out_ref, q_out_ref):
    s = s_ref[0]                                           # (TL, 2d)
    p = pos_ref[0]                                         # (TL, d)
    p_out_ref[0] = (jnp.dot(s, wsmin_ref[...], preferred_element_type=jnp.float32)
                    + jnp.dot(p, wpmin_ref[...], preferred_element_type=jnp.float32)
                    + b1_ref[...])
    q_out_ref[0] = (jnp.dot(s, wsmax_ref[...], preferred_element_type=jnp.float32)
                    + jnp.dot(p, wpmax_ref[...], preferred_element_type=jnp.float32))


def pair_projection(t, pos_cl, hp):
    B, L, E = t.shape
    d = pos_cl.shape[2]
    TL = _pick_row_block(L)
    nT = L // TL
    full = lambda a: pl.BlockSpec(a.shape, lambda b, r: (0,) * a.ndim)
    return pl.pallas_call(
        _pair_proj_kernel,
        out_shape=(jax.ShapeDtypeStruct((B, L, d), jnp.float32),
                   jax.ShapeDtypeStruct((B, L, d), jnp.float32)),
        grid=(B, nT),
        in_specs=[pl.BlockSpec((1, TL, E), lambda b, r: (b, r, 0)),
                  pl.BlockSpec((1, TL, d), lambda b, r: (0, r, 0)),  # pos shared over batch
                  full(hp['w1_smin']), full(hp['w1_smax']),
                  full(hp['w1_pmin']), full(hp['w1_pmax']), full(hp['b1'])],
        out_specs=(pl.BlockSpec((1, TL, d), lambda b, r: (b, r, 0)),
                   pl.BlockSpec((1, TL, d), lambda b, r: (b, r, 0))),
        compiler_params=pltpu.CompilerParams(
            dimension_semantics=("parallel", "parallel")),
    )(t, pos_cl, hp['w1_smin'], hp['w1_smax'], hp['w1_pmin'], hp['w1_pmax'], hp['b1'])


# -------- Kernel 3b: pairwise contact head, (B, L//TI) row-block grid ------------------
# Per row i the whole (d, L) h1 slab is built with lane-dense selects, the d x d 1x1 conv
# runs on the MXU as (d,d)@(d,L), and rows are assembled in groups of 8 so live values
# stay small; the (8, L) group is stored with one aligned dynamic-sublane store.

def _contact_head_kernel(pt_ref, qt_ref, w2t_ref, b2_ref, w3_ref, b3_ref, out_ref,
                         *, n_groups, tail_rows):
    d = pt_ref.shape[1]
    L = pt_ref.shape[2]
    TI = out_ref.shape[1]
    i0 = pl.program_id(1) * TI

    pt = pt_ref[0]                 # (d, L)  P^T  (b1 already folded into P)
    qt = qt_ref[0]                 # (d, L)  Q^T
    w2t = w2t_ref[...]             # (d, d)  w2t[e, c] = W2[c, e]
    b2 = b2_ref[...]               # (d, 1)
    w3 = w3_ref[...]               # (d, 1)
    b3 = b3_ref[...]               # (1, 1)

    col = jax.lax.broadcasted_iota(jnp.int32, (1, L), 1)
    sub = jax.lax.broadcasted_iota(jnp.int32, (8, L), 0)

    def one_row(i_glob):
        # h1[c, j] = relu(P[min(i,j), c] + Q[max(i,j), c]) for the fixed row i = i_glob
        mask = col <= i_glob                                      # (1, L): j <= i
        onehot = (col == i_glob).astype(jnp.float32)              # (1, L)
        p_i = jnp.sum(pt * onehot, axis=1, keepdims=True)         # (d, 1) = P[i]^T
        q_i = jnp.sum(qt * onehot, axis=1, keepdims=True)         # (d, 1) = Q[i]^T
        h1 = jnp.maximum(jnp.where(mask, pt, qt) + jnp.where(mask, q_i, p_i), 0.0)
        # second 1x1 conv (d->d) on the MXU, ReLU
        h2 = jnp.maximum(jnp.dot(w2t, h1, preferred_element_type=jnp.float32) + b2, 0.0)
        # final 1x1 conv (d->1) as a scalar-weighted sublane reduce
        return jnp.sum(h2 * w3, axis=0, keepdims=True) + b3       # (1, L)

    if n_groups > 0:
        def group_body(g, carry):
            r0 = pl.multiple_of(g * 8, 8)
            block = jnp.zeros((8, L), jnp.float32)
            for r in range(8):                                    # static 8-row unroll
                block = jnp.where(sub == r, one_row(i0 + r0 + r), block)
            out_ref[0, pl.ds(r0, 8), :] = block
            return carry
        jax.lax.fori_loop(0, n_groups, group_body, 0)

    for r in range(tail_rows):                                    # static tail (< 8 rows)
        rl = n_groups * 8 + r
        out_ref[0, pl.ds(rl, 1), :] = one_row(i0 + rl)


def contact_head(P, Q, hp, block_rows=None):
    B, L, d = P.shape
    TI = block_rows if block_rows is not None else _pick_row_block(L)
    assert L % TI == 0, "row-block size must divide L"
    nR = L // TI
    n_groups, tail = TI // 8, TI % 8
    Pt = jnp.transpose(P, (0, 2, 1))                      # (B, d, L) channels-first
    Qt = jnp.transpose(Q, (0, 2, 1))
    w2t = jnp.transpose(hp['w2'])                         # (d, d): rows = out channel
    b2c = hp['b2'].reshape(d, 1)
    w3c = hp['w3'].reshape(d, 1)
    b3c = hp['b3'].reshape(1, 1)
    kernel = functools.partial(_contact_head_kernel, n_groups=n_groups, tail_rows=tail)
    return pl.pallas_call(
        kernel,
        out_shape=jax.ShapeDtypeStruct((B, L, L), jnp.float32),
        grid=(B, nR),
        in_specs=[pl.BlockSpec((1, d, L), lambda b, r: (b, 0, 0)),   # Pt (full per batch)
                  pl.BlockSpec((1, d, L), lambda b, r: (b, 0, 0)),   # Qt
                  pl.BlockSpec((d, d), lambda b, r: (0, 0)),         # W2^T  (VMEM, MXU)
                  pl.BlockSpec((d, 1), lambda b, r: (0, 0)),
                  pl.BlockSpec((d, 1), lambda b, r: (0, 0)),
                  pl.BlockSpec((1, 1), lambda b, r: (0, 0))],
        out_specs=pl.BlockSpec((1, TI, L), lambda b, r: (b, r, 0)),
        compiler_params=pltpu.CompilerParams(
            dimension_semantics=("parallel", "parallel")),
    )(Pt, Qt, w2t, b2c, w3c, b3c)


# ---------------- Deterministic parameter construction (synthetic, no checkpoint) -----

def init_params(key, d, L, n_layers=3, nhead=2, dim_ff=2048):
    E = 2 * d
    ks = jax.random.split(key, 64)
    it = iter(ks)
    nrm = lambda shape, scale=0.1: scale * jax.random.normal(next(it), shape, jnp.float32)
    uni = lambda shape: jax.random.uniform(next(it), shape, jnp.float32, minval=0.5, maxval=1.5)
    eps = 1e-5
    bf16 = jnp.bfloat16

    params = {'d': d, 'L': L, 'nhead': nhead}

    # conv1d1 (d, 4, 9) + BatchNorm1d(d) in eval mode, folded into scale/shift.
    conv_w = nrm((d, 4, 9))
    conv_b = nrm((d,))
    g1, be1, rm1, rv1 = uni((d,)), nrm((d,)), nrm((d,)), uni((d,))
    s1 = g1 / jnp.sqrt(rv1 + eps)
    params['conv1d'] = {'w_conv': conv_w,
                        'scale': s1.reshape(d, 1),
                        'shift': (s1 * (conv_b - rm1) + be1).reshape(d, 1)}

    # position_embedding_1d: (1, d, 600) originally; sized to L (forward needs L == 600).
    params['pos_emb'] = jax.random.normal(next(it), (1, d, L), jnp.float32)

    # 3 x TransformerEncoderLayer(2d, nhead=2, dim_feedforward=2048), post-norm, relu.
    layers = []
    for _ in range(n_layers):
        layers.append({
            'wqkv': nrm((E, 3 * E)).astype(bf16), 'bqkv': nrm((1, 3 * E)),
            'wo': nrm((E, E)).astype(bf16), 'bo': nrm((1, E)),
            'ln1_w': uni((1, E)), 'ln1_b': nrm((1, E)),
            'w1': nrm((E, dim_ff)).astype(bf16), 'b1': nrm((1, dim_ff)),
            'w2': nrm((dim_ff, E)).astype(bf16), 'b2': nrm((1, E)),
            'ln2_w': uni((1, E)), 'ln2_b': nrm((1, E)),
        })
    params['layers'] = layers

    # conv_test_1 (6d->d)+BN2d, conv_test_2 (d->d)+BN2d, conv_test_3 (d->1); 1x1, BN folded.
    w1c, bc1 = nrm((d, 6 * d)), nrm((d,))
    g, be, rm, rv = uni((d,)), nrm((d,)), nrm((d,)), uni((d,))
    sA = g / jnp.sqrt(rv + eps)
    W1 = (w1c * sA[:, None]).T                    # (6d, d): feat @ W1
    b1h = (sA * (bc1 - rm) + be).reshape(1, d)
    w2c, bc2 = nrm((d, d)), nrm((d,))
    g2, be2, rm2, rv2 = uni((d,)), nrm((d,)), nrm((d,)), uni((d,))
    sB = g2 / jnp.sqrt(rv2 + eps)
    W2 = (w2c * sB[:, None]).T                    # (d, d): h1 @ W2
    b2h = sB * (bc2 - rm2) + be2                  # (d,)
    w3c, bc3 = nrm((1, d)), nrm((1,))
    params['head'] = {'w1_full': W1, 'b1': b1h, 'w2': W2, 'b2': b2h,
                      'w3': w3c[0], 'b3': bc3}
    return params


# ---------------- Forward (glue: transposes / concat / parameter plumbing only) -------

def contact_attention_simple_forward(params, prior, seq, state, block_rows=None):
    del prior, state                     # unused, exactly as in the reference forward
    B, L, _ = seq.shape
    d = params['d']
    x = jnp.transpose(seq, (0, 2, 1)).astype(jnp.float32)             # (B, 4, L)  NCW
    conv_cl = conv1d_bn_relu(x, params['conv1d'], L, d)               # (B, L, d)
    pos_cl = jnp.transpose(params['pos_emb'], (0, 2, 1))              # (1, L, d)
    t = jnp.concatenate(
        [conv_cl, jnp.broadcast_to(pos_cl, (B, L, d))], axis=-1)      # (B, L, 2d)
    for lp in params['layers']:
        t = transformer_layer(t, lp, params['nhead'])
    hp = params['head']
    w1 = hp['w1_full']
    split = {'w1_smin': w1[:2 * d], 'w1_smax': w1[2 * d:4 * d],
             'w1_pmin': w1[4 * d:5 * d], 'w1_pmax': w1[5 * d:], 'b1': hp['b1']}
    P, Q = pair_projection(t, pos_cl, split)                          # (B, L, d) each
    # The pair features depend only on (min(i,j), max(i,j)) so the contact map is
    # already symmetric; the reference's 0.5*(c + c^T) is a numerical no-op -> dropped.
    return contact_head(P, Q, hp, block_rows=block_rows)              # (B, L, L)


# ---------------- Pure-JAX reference (literal tril-based matrix_rep) -------------------

def forward_reference(params, seq):
    B, L, _ = seq.shape
    d = params['d']
    E = 2 * d
    nhead = params['nhead']
    hd = E // nhead
    bf16 = jnp.bfloat16
    cp = params['conv1d']
    x = jnp.transpose(seq, (0, 2, 1)).astype(jnp.float32)
    z = jax.lax.conv_general_dilated(x, cp['w_conv'], window_strides=(1,),
                                     padding=((8, 8),), rhs_dilation=(2,),
                                     dimension_numbers=('NCH', 'OIH', 'NCH'))
    conv = jnp.maximum(z * cp['scale'][None] + cp['shift'][None], 0.0)   # (B, d, L)
    pos = jnp.broadcast_to(params['pos_emb'], (B, d, L))
    t = jnp.transpose(jnp.concatenate([conv, pos], axis=1), (0, 2, 1))   # (B, L, E)

    inv_sqrt = 1.0 / math.sqrt(hd)
    for lp in params['layers']:
        xb = t.astype(bf16)
        qkv = jnp.einsum('ble,ef->blf', xb, lp['wqkv'],
                         preferred_element_type=jnp.float32) + lp['bqkv']
        heads = []
        for h in range(nhead):
            q = qkv[..., h * hd:(h + 1) * hd]
            k = qkv[..., E + h * hd:E + (h + 1) * hd]
            v = qkv[..., 2 * E + h * hd:2 * E + (h + 1) * hd]
            s = jnp.einsum('bqh,bkh->bqk', (q * inv_sqrt).astype(bf16), k.astype(bf16),
                           preferred_element_type=jnp.float32)
            p = jax.nn.softmax(s, axis=-1)
            heads.append(jnp.einsum('bqk,bkh->bqh', p.astype(bf16), v.astype(bf16),
                                    preferred_element_type=jnp.float32))
        attn = jnp.concatenate(heads, axis=-1)
        attn = jnp.einsum('blh,he->ble', attn.astype(bf16), lp['wo'],
                          preferred_element_type=jnp.float32) + lp['bo']
        x1 = _layer_norm(t + attn, lp['ln1_w'], lp['ln1_b'])
        h1 = jnp.maximum(jnp.einsum('ble,ef->blf', x1.astype(bf16), lp['w1'],
                                    preferred_element_type=jnp.float32) + lp['b1'], 0.0)
        ff = jnp.einsum('blf,fe->ble', h1.astype(bf16), lp['w2'],
                        preferred_element_type=jnp.float32) + lp['b2']
        t = _layer_norm(x1 + ff, lp['ln2_w'], lp['ln2_b'])

    def matrix_rep(xcf):                       # literal port of the PyTorch matrix_rep
        y = jnp.transpose(xcf, (0, 2, 1))      # (B, L, C)
        C = y.shape[-1]
        a = jnp.broadcast_to(y[:, None, :, :], (B, L, L, C))     # [b,i,j,c] = y[b,j,c]
        b2_ = jnp.broadcast_to(y[:, :, None, :], (B, L, L, C))   # [b,i,j,c] = y[b,i,c]
        mat = jnp.transpose(jnp.concatenate([a, b2_], axis=-1), (0, 3, 1, 2))
        tril = jnp.tril(mat)
        diag = tril - jnp.tril(mat, k=-1)
        return tril + jnp.swapaxes(tril, -1, -2) - diag

    hp = params['head']
    seq_cf = jnp.transpose(t, (0, 2, 1))                                  # (B, 2d, L)
    infor = jnp.concatenate([matrix_rep(seq_cf), matrix_rep(pos)], axis=1)  # (B,6d,L,L)
    h1 = jnp.maximum(jnp.einsum('bcij,ce->beij', infor, hp['w1_full'])
                     + hp['b1'].reshape(1, d, 1, 1), 0.0)
    h2 = jnp.maximum(jnp.einsum('bcij,ce->beij', h1, hp['w2'])
                     + hp['b2'].reshape(1, d, 1, 1), 0.0)
    out = jnp.einsum('bcij,c->bij', h2, hp['w3']) + hp['b3'][0]
    return 0.5 * (out + jnp.swapaxes(out, -1, -2))


if __name__ == "__main__":
    B, L, d = 2, 16, 8
    key = jax.random.PRNGKey(0)
    pkey, skey, prkey = jax.random.split(key, 3)
    params = init_params(pkey, d, L)

    seq = jax.random.uniform(skey, (B, L, 4), jnp.float32)            # L x 4 sequence feats
    prior = jax.random.uniform(prkey, (B, L, L, 1), jnp.float32)      # unused by forward
    state = jnp.zeros((B, L, L), jnp.float32)                         # unused by forward

    # block_rows=8 -> 2 row blocks at L=16, exercising the (B, L//TI) contact-head tiling.
    contact = contact_attention_simple_forward(params, prior, seq, state, block_rows=8)
    contact = jax.block_until_ready(contact)

    assert contact.shape == (B, L, L)
    assert bool(jnp.all(jnp.isfinite(contact)))
    # symmetric by construction of the min/max pair features
    assert bool(jnp.allclose(contact, jnp.transpose(contact, (0, 2, 1)), atol=1e-5))
    # pure-JAX reference check (literal tril matrix_rep) -- validates the W1 min/max
    # split, the im2col dilated conv and the fused-QKV transformer against plain XLA.
    ref = forward_reference(params, seq)
    assert bool(jnp.allclose(contact, ref, rtol=2e-2, atol=2e-2)), \
        f"max diff vs reference: {float(jnp.max(jnp.abs(contact - ref)))}"
    print("KERNEL_OK")
</pallas_src>

<mosaic_0001>
module attributes {stable_mosaic.version = 11 : i64} {
  func.func @_conv1d_bn_relu_kernel(%arg0: i32, %arg1: memref<36x32xf32, #tpu.memory_space<vmem>>, %arg2: memref<8x36xf32, #tpu.memory_space<vmem>>, %arg3: memref<8x1xf32, #tpu.memory_space<vmem>>, %arg4: memref<8x1xf32, #tpu.memory_space<vmem>>, %arg5: memref<8x32xf32, #tpu.memory_space<vmem>>) attributes {dimension_semantics = [#tpu.dimension_semantics<parallel>], iteration_bounds = array<i64: 1>, scalar_prefetch = 0 : i64, scratch_operands = 0 : i64, tpu.core_type = #tpu.core_type<tc>, window_params = [{transform_indices = @transform_0, window_bounds = array<i64: 36, 32>}, {pipeline_mode = #tpu.pipeline_mode<synchronous>, transform_indices = @transform_1, window_bounds = array<i64: 8, 36>}, {pipeline_mode = #tpu.pipeline_mode<synchronous>, transform_indices = @transform_2, window_bounds = array<i64: 8, 1>}, {pipeline_mode = #tpu.pipeline_mode<synchronous>, transform_indices = @transform_3, window_bounds = array<i64: 8, 1>}, {transform_indices = @transform_4, window_bounds = array<i64: 8, 32>}]} {
    %c0 = arith.constant 0 : index
    %c0_0 = arith.constant 0 : index
    %0 = vector.load %arg2[%c0, %c0_0] : memref<8x36xf32, #tpu.memory_space<vmem>>, vector<8x36xf32>
    %c0_1 = arith.constant 0 : index
    %c0_2 = arith.constant 0 : index
    %1 = vector.load %arg1[%c0_1, %c0_2] : memref<36x32xf32, #tpu.memory_space<vmem>>, vector<36x32xf32>
    %cst = arith.constant dense<0.000000e+00> : vector<8x32xf32>
    %2 = tpu.matmul %0, %1, %cst {dimension_numbers = #tpu.dot_dimension_numbers<[1], [0], [0], [1], [0, 0, 1, 1], [], []>} : vector<8x36xf32>, vector<36x32xf32>, vector<8x32xf32> -> vector<8x32xf32>
    %c0_3 = arith.constant 0 : index
    %c0_4 = arith.constant 0 : index
    %3 = vector.load %arg3[%c0_3, %c0_4] : memref<8x1xf32, #tpu.memory_space<vmem>>, vector<8x1xf32>
    %4 = vector.broadcast %3 : vector<8x1xf32> to vector<8x32xf32>
    %5 = arith.mulf %2, %4 : vector<8x32xf32>
    %c0_5 = arith.constant 0 : index
    %c0_6 = arith.constant 0 : index
    %6 = vector.load %arg4[%c0_5, %c0_6] : memref<8x1xf32, #tpu.memory_space<vmem>>, vector<8x1xf32>
    %7 = vector.broadcast %6 : vector<8x1xf32> to vector<8x32xf32>
    %8 = arith.addf %5, %7 : vector<8x32xf32>
    %cst_7 = arith.constant 0.000000e+00 : f32
    %9 = vector.broadcast %cst_7 : f32 to vector<8x32xf32>
    %10 = arith.maximumf %8, %9 : vector<8x32xf32>
    %c0_8 = arith.constant 0 : index
    %c0_9 = arith.constant 0 : index
    %11 = vector.load %arg5[%c0_8, %c0_9] : memref<8x32xf32, #tpu.memory_space<vmem>>, vector<8x32xf32>
    tpu.vector_store %arg5[%c0_8, %c0_9], %10 {strides = array<i32>} : memref<8x32xf32, #tpu.memory_space<vmem>>, vector<8x32xf32>,
    return
  }
  func.func @transform_0(%arg0: i32) -> (i32, i32) {
    %c0_i32 = arith.constant 0 : i32
    %c0_i32_0 = arith.constant 0 : i32
    return %c0_i32, %arg0 : i32, i32
  }
  func.func @transform_1(%arg0: i32) -> (i32, i32) {
    %c0_i32 = arith.constant 0 : i32
    %c0_i32_0 = arith.constant 0 : i32
    %c0_i32_1 = arith.constant 0 : i32
    return %c0_i32, %c0_i32_0 : i32, i32
  }
  func.func @transform_2(%arg0: i32) -> (i32, i32) {
    %c0_i32 = arith.constant 0 : i32
    %c0_i32_0 = arith.constant 0 : i32
    %c0_i32_1 = arith.constant 0 : i32
    return %c0_i32, %c0_i32_0 : i32, i32
  }
  func.func @transform_3(%arg0: i32) -> (i32, i32) {
    %c0_i32 = arith.constant 0 : i32
    %c0_i32_0 = arith.constant 0 : i32
    %c0_i32_1 = arith.constant 0 : i32
    return %c0_i32, %c0_i32_0 : i32, i32
  }
  func.func @transform_4(%arg0: i32) -> (i32, i32) {
    %c0_i32 = arith.constant 0 : i32
    %c0_i32_0 = arith.constant 0 : i32
    return %c0_i32, %arg0 : i32, i32
  }
}

</mosaic_0001>

<llo_original>
// kernel: tpu_custom_call.1
$region0: #{tpu_custom_call.1}
  #allocation0 [shape = 'u32[]', space=smem, size = 0x4, offset = 0x4, fixed_abs, tag = 'smem constant byte address 0x4 - core index']
  #allocation1 [shape = 'u32[144,128]{1,0:T(1,128)}', space=vmem, size = 0x12000, scoped, tag = 'internal scratch']
  %s0 = inlined_call_operand.vmem [shape: f32[36,32], index: 0, kind: input, shape index: {}]
  %s1 = inlined_call_operand.vmem [shape: f32[8,36], index: 1, kind: input, shape index: {}]
  %s2 = inlined_call_operand.vmem [shape: f32[8,1], index: 2, kind: input, shape index: {}]
  %s3 = inlined_call_operand.vmem [shape: f32[8,1], index: 3, kind: input, shape index: {}]
  %s4 = inlined_call_operand.hbm [shape: f32[8,32], index: 4, kind: output, shape index: {}]
  %s5 = sld [smem:[#allocation0]]
  $region26: #{tpu_custom_call.1} parent=0
    _
  %s7 = ssub.s32 1, %s5
  %s8 = scalar_select 0, %s7, %s5
  $region1: #{tpu_custom_call.1} parent=0
    #allocation2 [shape = 'u8[4096]{0}', space=vmem, size = 0x1000, scoped, tag = 'output window, operand 0, single buffered']
    #allocation3 [shape = 's32[1]{0}', space=sflag, size = 0x4, scoped, tag = 'scoped memory for tpu_custom_call.1']
    %9 = vsyncpa [#allocation3], 0
    // Predicated region
    $region2: #{tpu_custom_call.1} parent=1 // pred_check
      _
    $region3: #{tpu_custom_call.1} parent=1 // pred_check_branch
      %11 = sbr.rel (0) target = $region5
    $region4: #{tpu_custom_call.1} parent=1 // pred_region
      _
    $region5: #{tpu_custom_call.1} parent=1 // pred_fallthru
      _
    // Predicated region
    $region6: #{tpu_custom_call.1} parent=1 // pred_check
      _
    $region7: #{tpu_custom_call.1} parent=1 // pred_check_branch
      %13 = sbr.rel (0) target = $region9
    $region8: #{tpu_custom_call.1} parent=1 // pred_region
      _
    $region9: #{tpu_custom_call.1} parent=1 // pred_fallthru
      _
    // Predicated region
    $region10: #{tpu_custom_call.1} parent=1 // pred_check
      _
    $region11: #{tpu_custom_call.1} parent=1 // pred_check_branch
      %15 = sbr.rel (0) target = $region13
    $region12: #{tpu_custom_call.1} parent=1 // pred_region
      _
    $region13: #{tpu_custom_call.1} parent=1 // pred_fallthru
      _
    // Predicated region
    $region14: #{tpu_custom_call.1} parent=1 // pred_check
      _
    $region15: #{tpu_custom_call.1} parent=1 // pred_check_branch
      %17 = sbr.rel (0) target = $region17
    $region16: #{tpu_custom_call.1} parent=1 // pred_region
      _
    $region17: #{tpu_custom_call.1} parent=1 // pred_fallthru
      _
    %v18 = vld [vmem:[%s1] sm:$0xff]
    %v19 = vld [vmem:[%s0] sm:$0xff]
    %v20 = vld [vmem:[%s0 + $0x8] sm:$0xff]
    %v21 = vld [vmem:[%s0 + $0x10] sm:$0xff]
    %v22 = vld [vmem:[%s0 + $0x18] sm:$0xff]
    %v23 = vld [vmem:[%s0 + $0x20] sm:$0xf]
    %vm24 = vcmask 293888
    %v26 = vsel %vm24, %v18, 0
    %vm28 = vcmask 1043456
    %v30 = vsel %vm28, %v23, 0
    %32 = vmatprep.subr.mxu0 0.0
    %33 = vmatpush1.msra.mxu0 %v19
    %34 = vmatprep.subr.mxu0 0.0
    %35 = vmatpush1.msra.mxu0 %v20
    %36 = vmatprep.subr.mxu0 0.0
    %37 = vmatpush1.msra.mxu0 %v21
    %38 = vmatprep.subr.mxu0 0.0
    %39 = vmatpush1.msra.mxu0 %v22
    %40 = vmatprep.subr.mxu0 0.0
    %41 = vmatpush1.msra.mxu0 %v30
    %42 = vmatprep.subr.mxu0 0.0
    %43 = vmatpush1.msra.mxu0 0.0
    %44 = vmatprep.subr.mxu0 0.0
    %45 = vmatpush1.msra.mxu0 0.0
    %46 = vmatprep.subr.mxu0 0.0
    %47 = vmatpush1.msra.mxu0 0.0
    %48 = vmatprep.subr.mxu0 0.0
    %49 = vmatpush1.msra.mxu0 0.0
    %50 = vmatprep.subr.mxu0 0.0
    %51 = vmatpush1.msra.mxu0 0.0
    %52 = vmatprep.subr.mxu0 0.0
    %53 = vmatpush1.msra.mxu0 0.0
    %54 = vmatprep.subr.mxu0 0.0
    %55 = vmatpush1.msra.mxu0 0.0
    %56 = vmatprep.subr.mxu0 0.0
    %57 = vmatpush1.msra.mxu0 0.0
    %58 = vmatprep.subr.mxu0 0.0
    %59 = vmatpush1.msra.mxu0 0.0
    %60 = vmatprep.subr.mxu0 0.0
    %61 = vmatpush1.msra.mxu0 0.0
    %62 = vmatprep.subr.mxu0 0.0
    %63 = vmatpush1.msra.mxu0 0.0
    %64 = vmatprep.subr.mxu0 0.0
    %65 = vmatpush1.msra.mxu0 0.0
    %66 = vmatprep.subr.mxu0 0.0
    %67 = vmatpush1.msra.mxu0 0.0
    %68 = vmatprep.subr.mxu0 0.0
    %69 = vmatpush1.msra.mxu0 0.0
    %70 = vmatprep.subr.mxu0 0.0
    %71 = vmatpush1.msra.mxu0 0.0
    %72 = vmatprep.subr.mxu0 0.0
    %73 = vmatpush1.msra.mxu0 0.0
    %74 = vmatprep.subr.mxu0 0.0
    %75 = vmatpush1.msra.mxu0 0.0
    %76 = vmatprep.subr.mxu0 0.0
    %77 = vmatpush1.msra.mxu0 0.0
    %78 = vmatprep.subr.mxu0 0.0
    %79 = vmatpush1.msra.mxu0 0.0
    %80 = vmatprep.subr.mxu0 0.0
    %81 = vmatpush1.msra.mxu0 0.0
    %82 = vmatprep.subr.mxu0 0.0
    %83 = vmatpush1.msra.mxu0 0.0
    %84 = vmatprep.subr.mxu0 0.0
    %85 = vmatpush1.msra.mxu0 0.0
    %86 = vmatprep.subr.mxu0 0.0
    %87 = vmatpush1.msra.mxu0 0.0
    %88 = vmatprep.subr.mxu0 0.0
    %89 = vmatpush1.msra.mxu0 0.0
    %90 = vmatprep.subr.mxu0 0.0
    %91 = vmatpush1.msra.mxu0 0.0
    %92 = vmatprep.subr.mxu0 0.0
    %93 = vmatpush1.msra.mxu0 0.0
    %94 = vmatprep.subr.mxu0 0.0
    %95 = vmatpush1.msra.mxu0 0.0
    %96 = vmatprep.mubr.f32.mxu0 0.0
    %97 = vmatmul.mubr.f32.gmra.mrb[0].mxu0 %v26
    %v98 = vpop.f32.mrb[0].mxu0
    %v99 = vadd.f32 0.0, %v98
    %v100 = vpop.f32.mrb[0].mxu0
    %101 = vdwg.mxu0
    %v102 = vld [vmem:[%s2] sm:$0xff]
    %104 = vset.pattern.permute.xlu0 0
    %105 = vperm.xlu0 %104, %v102
    %v106 = vpop.permute.xlu0 %105
    %v108 = vmul.f32 %v99, %v106
    %v109 = vld [vmem:[%s3] sm:$0xff]
    %111 = vset.pattern.permute.xlu0 0
    %112 = vperm.xlu0 %111, %v109
    %v113 = vpop.permute.xlu0 %112
    %v115 = vadd.f32 %v108, %v113
    %v116 = vmax.f32 %v115, 0.0
    %vm117 = vcmask 261120
    %118 = vst.msk [vmem:[#allocation2] sm:$0xff] %vm117, %v116
    // Predicated region
    $region18: #{tpu_custom_call.1} parent=1 // pred_check
      _
    $region19: #{tpu_custom_call.1} parent=1 // pred_check_branch
      %120 = sbr.rel (0) target = $region21
    $region20: #{tpu_custom_call.1} parent=1 // pred_region
      %s122 = ssub.s32 128, 128
      %123 = vsyncadd [#allocation3], %s122
      %s125 = sshll.u32 [#allocation2], 4
      %s126 = int_to_ptr.vmem [resolvable:$true] %s125
      %128 = dma.vmem_to_hbm [thread:$0]  %s126, 128, %s4, [#allocation3]
    $region21: #{tpu_custom_call.1} parent=1 // pred_fallthru
      _
    // Predicated region
    $region22: #{tpu_custom_call.1} parent=1 // pred_check
      _
    $region23: #{tpu_custom_call.1} parent=1 // pred_check_branch
      %130 = sbr.rel (0) target = $region25
    $region24: #{tpu_custom_call.1} parent=1 // pred_region
      %131 = dma.done [#allocation3], 128
    $region25: #{tpu_custom_call.1} parent=1 // pred_fallthru
      _
    %132 = vsyncpa [#allocation3], 1

</llo_original>
